<compile_context>
chip_gen: v5e
topology: v5e:2x2
jax: 0.10.0
libtpu: 0.0.40
codegen_flags: <defaults>
</compile_context>

<pallas_src>
import functools

import jax
import jax.numpy as jnp
from jax import lax
from jax.experimental import pallas as pl
from jax.experimental.pallas import tpu as pltpu


def _soft_ce_rowsum(logits_f32, target_f32):
    """sum over rows and classes of -target * log_softmax(logits)  (f32)."""
    m = jnp.max(logits_f32, axis=-1, keepdims=True)
    s = logits_f32 - m
    lse = jnp.log(jnp.sum(jnp.exp(s), axis=-1, keepdims=True))   # EUP exp/log
    logp = s - lse
    return jnp.sum(-target_f32 * logp)


def _relabel_loss_kernel(mix_ref, logits_ref, aux_ref, t_ref, trev_ref,
                         out_ref, acc_ref, *,
                         cls_weight, dense_weight, inv_n, sub):
    k = pl.program_id(1)                       # N-chunk (reduction) axis

    @pl.when(k == 0)
    def _init():
        acc_ref[...] = jnp.zeros_like(acc_ref)

    tb, tn, c = aux_ref.shape
    n_full = tn // sub
    rem = tn - n_full * sub

    # Accumulate the token sum of this N-chunk in sublane-sized pieces so the
    # f32 upcast never materializes a full-tile temporary.
    def chunk_body(j, acc):
        off = pl.multiple_of(j * sub, sub)
        blk = aux_ref[:, pl.ds(off, sub), :].astype(jnp.float32)
        return acc + jnp.sum(blk, axis=1)

    part = jnp.zeros((tb, c), jnp.float32)
    if n_full > 0:
        part = lax.fori_loop(0, n_full, chunk_body, part,
                             unroll=bool(n_full <= 8))
    if rem > 0:
        blk = aux_ref[:, pl.ds(n_full * sub, rem), :].astype(jnp.float32)
        part = part + jnp.sum(blk, axis=1)
    acc_ref[...] += part

    # All softmax-CE work happens once per batch block, on the last N-chunk.
    @pl.when(k == pl.num_programs(1) - 1)
    def _finalize():
        mix = mix_ref[0]                               # (1-lam) or 0, from SMEM
        t = t_ref[...].astype(jnp.float32)             # (tb, C)

        # trev_ref holds target batch-block (nb-1-i); reversing its rows gives
        # flip(target, 0) for this block.  The reversal runs on the otherwise
        # idle MXU as a permutation matmul (guaranteed lowering, ~zero cost).
        trev = trev_ref[...].astype(jnp.float32)
        rows = lax.broadcasted_iota(jnp.int32, (tb, tb), 0)
        cols = lax.broadcasted_iota(jnp.int32, (tb, tb), 1)
        rev_mat = jnp.where(rows + cols == tb - 1, 1.0, 0.0).astype(jnp.float32)
        tflip = jnp.dot(rev_mat, trev, preferred_element_type=jnp.float32)

        # lam*t + (1-lam)*flip(t)   (== t when lam >= 1 since mix == 0)
        tcls = t + mix * (tflip - t)

        logits = logits_ref[...].astype(jnp.float32)   # (tb, C) cls logits
        pooled = acc_ref[...] * inv_n                  # aux_output.mean(1), f32

        partial = (cls_weight * _soft_ce_rowsum(logits, tcls)
                   + dense_weight * _soft_ce_rowsum(pooled, t))

        # Lane-dense (8,128)-aligned per-block slab; wrapper reads [i, 0, 0].
        out_ref[...] = jnp.full(out_ref.shape, partial, dtype=jnp.float32)


def _physical_vmem_bytes():
    """Per-core VMEM capacity; conservative 64 MiB fallback (v7x) if unknown."""
    try:
        cap = getattr(pltpu.get_tpu_info(), "vmem_capacity_bytes", None)
        if cap:
            return int(cap)
    except Exception:
        pass
    return 64 << 20


def _choose_tiles(B, N, C, aux_itemsize, small_row_bytes, aux_budget,
                  step_budget, max_tb, n_buf):
    """Pick (tb, tn): batch tile and N-chunk tile.

    Prefers the largest batch tile that keeps the whole N resident (single
    reduction step); falls back to the smallest legal batch tile plus N
    chunking when N*C is too big for the per-step VMEM budget.
    """
    def tb_ok(t):
        return B % t == 0 and (t % 8 == 0 or t == B)

    def tn_ok(t):
        return N % t == 0 and (t % 8 == 0 or t == N)

    def fits(tb, tn):
        aux = n_buf * tb * tn * C * aux_itemsize
        return aux <= aux_budget and aux + tb * small_row_bytes <= step_budget

    tb_cands = [t for t in range(min(B, max_tb), 0, -1) if tb_ok(t)] or [B]
    tn_cands = [t for t in range(N, 0, -1) if tn_ok(t)]     # always contains N

    for tb in tb_cands:            # phase 1: full N, biggest batch tile
        if fits(tb, N):
            return tb, N
    tb = tb_cands[-1]              # phase 2: minimal batch tile, chunk N
    for tn in tn_cands:
        if fits(tb, tn):
            return tb, tn
    return tb, tn_cands[-1]        # best effort (vmem_limit is clamped anyway)


def relabel_pooled_cross_entropy(output, aux_output, bb, target,
                                 dense_weight=1.0, cls_weight=1.0,
                                 tb=None, tn=None, aux_buffer_count=2):
    """JAX/Pallas equivalent of RelabelPooledCrossEntropy.forward."""
    bbx1, bby1, bbx2, bby2 = bb
    B, N, C = aux_output.shape
    assert output.shape == (B, C) and target.shape == (B, C)

    # lam and the target-mixing coefficient (scalar glue, done once).
    lam = jnp.asarray(1.0 - (bbx2 - bbx1) * (bby2 - bby1) / N, jnp.float32)
    mix = jnp.where(lam < 1.0, 1.0 - lam, 0.0).reshape(1).astype(jnp.float32)

    aux_isz = aux_output.dtype.itemsize
    sub = max(8, 32 // aux_isz)            # sublane quantum of the aux dtype

    # Generation-aware VMEM budgets (clamp to physical VMEM minus headroom).
    cap = _physical_vmem_bytes()
    headroom = max(8 << 20, cap // 8)      # 8 MiB on v7x, 16 MiB on v5e/v6e
    limit_cap = max(cap - headroom, 24 << 20)
    aux_budget = min(cap // 3, 40 << 20)   # all aux buffers together
    step_budget = limit_cap - (4 << 20)

    # ~bytes per batch row besides the aux tile: double-buffered small inputs,
    # the f32 scratch accumulator and the finalize-path f32 temporaries.
    small_row_bytes = C * (2 * (output.dtype.itemsize
                                + 2 * target.dtype.itemsize) + 16 * 4)

    n_buf = max(2, int(aux_buffer_count))
    max_tb = B // 2 if B >= 16 else B      # keep nb >= 2 (both v7x TCs busy)
    if tb is None or tn is None:
        auto_tb, auto_tn = _choose_tiles(B, N, C, aux_isz, small_row_bytes,
                                         aux_budget, step_budget, max_tb, n_buf)
        tb = auto_tb if tb is None else tb
        tn = auto_tn if tn is None else tn
    assert B % tb == 0 and (tb % 8 == 0 or tb == B), (B, tb)
    assert N % tn == 0 and (tn % 8 == 0 or tn == N), (N, tn)
    nb, kb = B // tb, N // tn

    kernel = functools.partial(
        _relabel_loss_kernel,
        cls_weight=float(cls_weight),
        dense_weight=float(dense_weight),
        inv_n=1.0 / N,
        sub=sub,
    )

    # Per-step VMEM need, clamped to physical VMEM minus headroom.
    aux_tile = tb * tn * C * aux_isz
    small_tiles = tb * C * (output.dtype.itemsize + 2 * target.dtype.itemsize)
    needed = (n_buf * aux_tile + 2 * small_tiles + 16 * tb * C * 4
              + tb * min(tn, sub) * C * 4 + 2 * 8 * 128 * 4 + (2 << 20))
    vmem_limit = int(min(max(needed, 32 << 20), limit_cap))

    # Optional deeper aux pipelining: only worth enabling on 128-MiB-VMEM chips
    # with modest tiles; the default of 2 keeps v7x's 64 MiB safe.
    aux_kwargs = {}
    if n_buf > 2:
        aux_kwargs["pipeline_mode"] = pl.Buffered(n_buf)
    aux_spec = pl.BlockSpec((tb, tn, C), lambda i, k: (i, k, 0), **aux_kwargs)

    cost = pl.CostEstimate(
        flops=int(B * N * C + 14 * B * C),
        transcendentals=int(2 * B * C),
        bytes_accessed=int(B * N * C * aux_isz
                           + B * C * (output.dtype.itemsize
                                      + 2 * target.dtype.itemsize)
                           + nb * 8 * 128 * 4),
    )

    slab = pl.pallas_call(
        kernel,
        grid=(nb, kb),
        in_specs=[
            pl.BlockSpec(memory_space=pltpu.MemorySpace.SMEM),     # mix (1,)
            pl.BlockSpec((tb, C), lambda i, k: (i, 0)),            # cls logits
            aux_spec,                                              # aux (B,N,C)
            pl.BlockSpec((tb, C), lambda i, k: (i, 0)),            # target
            pl.BlockSpec((tb, C), lambda i, k: (nb - 1 - i, 0)),   # target, rev. block order
        ],
        out_specs=pl.BlockSpec((1, 8, 128), lambda i, k: (i, 0, 0)),
        out_shape=jax.ShapeDtypeStruct((nb, 8, 128), jnp.float32),
        scratch_shapes=[pltpu.VMEM((tb, C), jnp.float32)],
        compiler_params=pltpu.CompilerParams(
            dimension_semantics=("parallel", "arbitrary"),
            vmem_limit_bytes=vmem_limit,
        ),
        cost_estimate=cost,
    )(mix, output, aux_output, target, target)

    # Tiny final reduction in the wrapper: sum of per-block partials / B.
    return jnp.sum(slab[:, 0, 0]) / B


def _reference(output, aux_output, bb, target, dense_weight=1.0, cls_weight=1.0):
    """Pure-JAX reference mirroring the PyTorch module."""
    bbx1, bby1, bbx2, bby2 = bb
    B, N, C = aux_output.shape
    lam = 1.0 - (bbx2 - bbx1) * (bby2 - bby1) / N
    target_cls = target
    if lam < 1.0:
        target_cls = lam * target + (1.0 - lam) * jnp.flip(target, axis=0)
    pooled = jnp.mean(aux_output, axis=1)

    def soft_ce(x, t):
        logp = jax.nn.log_softmax(x, axis=-1)
        return jnp.mean(jnp.sum(-t * logp, axis=-1))

    return (cls_weight * soft_ce(output, target_cls)
            + dense_weight * soft_ce(pooled, target))


if __name__ == "__main__":
    key = jax.random.PRNGKey(0)
    B, N, C = 16, 16, 256        # batch, relabel tokens, classes (lane-aligned)

    k1, k2, k3 = jax.random.split(key, 3)
    output = jax.random.normal(k1, (B, C), dtype=jnp.float32)          # cls logits
    aux_output = jax.random.normal(k2, (B, N, C), dtype=jnp.float32)   # dense logits
    # Soft targets (rows sum to 1), e.g. from the relabel / mixup pipeline.
    target = jax.nn.softmax(jax.random.normal(k3, (B, C), dtype=jnp.float32),
                            axis=-1)

    bb = (1.0, 1.0, 3.0, 3.0)    # box area 4 over N=16 tokens -> lam = 0.75 < 1
    ref = _reference(output, aux_output, bb, target)

    # 1) Auto tiling: nb >= 2 batch blocks ("parallel"), single N chunk.
    loss = jax.block_until_ready(
        relabel_pooled_cross_entropy(output, aux_output, bb, target))
    assert jnp.allclose(loss, ref, rtol=1e-5, atol=1e-5), (loss, ref)

    # 2) Forced N chunking (tn=8 -> 2 "arbitrary" reduction steps per block).
    loss2 = jax.block_until_ready(
        relabel_pooled_cross_entropy(output, aux_output, bb, target, tn=8))
    assert jnp.allclose(loss2, ref, rtol=1e-5, atol=1e-5), (loss2, ref)

    # 3) lam >= 1 path (mix == 0, no target flipping).
    bb0 = (0.0, 0.0, 0.0, 0.0)
    ref0 = _reference(output, aux_output, bb0, target)
    loss3 = jax.block_until_ready(
        relabel_pooled_cross_entropy(output, aux_output, bb0, target))
    assert jnp.allclose(loss3, ref0, rtol=1e-5, atol=1e-5), (loss3, ref0)

    print("KERNEL_OK")
</pallas_src>

<mosaic_0001>
module attributes {stable_mosaic.version = 11 : i64} {
  func.func @_relabel_loss_kernel(%arg0: i32, %arg1: i32, %arg2: memref<1xf32, #tpu.memory_space<smem>>, %arg3: memref<8x256xf32, #tpu.memory_space<vmem>>, %arg4: memref<8x16x256xf32, #tpu.memory_space<vmem>>, %arg5: memref<8x256xf32, #tpu.memory_space<vmem>>, %arg6: memref<8x256xf32, #tpu.memory_space<vmem>>, %arg7: memref<1x8x128xf32, #tpu.memory_space<vmem>>, %arg8: memref<8x256xf32, #tpu.memory_space<vmem>>) attributes {dimension_semantics = [#tpu.dimension_semantics<parallel>, #tpu.dimension_semantics<arbitrary>], iteration_bounds = array<i64: 2, 1>, scalar_prefetch = 0 : i64, scratch_operands = 1 : i64, tpu.core_type = #tpu.core_type<tc>, window_params = [{transform_indices = @transform_0, window_bounds = array<i64: 1>}, {transform_indices = @transform_1, window_bounds = array<i64: 8, 256>}, {transform_indices = @transform_2, window_bounds = array<i64: 8, 16, 256>}, {transform_indices = @transform_3, window_bounds = array<i64: 8, 256>}, {transform_indices = @transform_4, window_bounds = array<i64: 8, 256>}, {transform_indices = @transform_5, window_bounds = array<i64: 1, 8, 128>}]} {
    %c0_i32 = arith.constant 0 : i32
    %0 = arith.cmpi eq, %arg1, %c0_i32 : i32
    %1 = arith.extui %0 : i1 to i32
    %c0_i32_0 = arith.constant 0 : i32
    %2 = arith.cmpi ne, %1, %c0_i32_0 : i32
    scf.if %2 {
      %cst_14 = arith.constant 0.000000e+00 : f32
      %22 = vector.broadcast %cst_14 : f32 to vector<8x256xf32>
      %c0_15 = arith.constant 0 : index
      %c0_16 = arith.constant 0 : index
      %23 = vector.load %arg8[%c0_15, %c0_16] : memref<8x256xf32, #tpu.memory_space<vmem>>, vector<8x256xf32>
      tpu.vector_store %arg8[%c0_15, %c0_16], %22 {strides = array<i32>} : memref<8x256xf32, #tpu.memory_space<vmem>>, vector<8x256xf32>,
    } else {
    }
    %cst = arith.constant 0.000000e+00 : f32
    %3 = vector.broadcast %cst : f32 to vector<8x256xf32>
    %c0_i32_1 = arith.constant 0 : i32
    %c8_i32 = arith.constant 8 : i32
    %4 = arith.muli %c0_i32_1, %c8_i32 : i32
    %5 = tpu.assume_multiple %4, 8 : i32
    %c0 = arith.constant 0 : index
    %6 = arith.index_cast %5 : i32 to index
    %c0_2 = arith.constant 0 : index
    %7 = vector.load %arg4[%c0, %6, %c0_2] : memref<8x16x256xf32, #tpu.memory_space<vmem>>, vector<8x8x256xf32>
    %cst_3 = arith.constant dense<0.000000e+00> : vector<8x256xf32>
    %8 = vector.multi_reduction <add>, %7, %cst_3 [1] : vector<8x8x256xf32> to vector<8x256xf32>
    %9 = arith.addf %3, %8 : vector<8x256xf32>
    %c1_i32 = arith.constant 1 : i32
    %c8_i32_4 = arith.constant 8 : i32
    %10 = arith.muli %c1_i32, %c8_i32_4 : i32
    %11 = tpu.assume_multiple %10, 8 : i32
    %c0_5 = arith.constant 0 : index
    %12 = arith.index_cast %11 : i32 to index
    %c0_6 = arith.constant 0 : index
    %13 = vector.load %arg4[%c0_5, %12, %c0_6] : memref<8x16x256xf32, #tpu.memory_space<vmem>>, vector<8x8x256xf32>
    %cst_7 = arith.constant dense<0.000000e+00> : vector<8x256xf32>
    %14 = vector.multi_reduction <add>, %13, %cst_7 [1] : vector<8x8x256xf32> to vector<8x256xf32>
    %15 = arith.addf %9, %14 : vector<8x256xf32>
    %c2_i32 = arith.constant 2 : i32
    %c0_8 = arith.constant 0 : index
    %c0_9 = arith.constant 0 : index
    %16 = vector.load %arg8[%c0_8, %c0_9] : memref<8x256xf32, #tpu.memory_space<vmem>>, vector<8x256xf32>
    %17 = arith.addf %16, %15 : vector<8x256xf32>
    %c0_10 = arith.constant 0 : index
    %c0_11 = arith.constant 0 : index
    %18 = vector.load %arg8[%c0_10, %c0_11] : memref<8x256xf32, #tpu.memory_space<vmem>>, vector<8x256xf32>
    tpu.vector_store %arg8[%c0_10, %c0_11], %17 {strides = array<i32>} : memref<8x256xf32, #tpu.memory_space<vmem>>, vector<8x256xf32>,
    %c0_i32_12 = arith.constant 0 : i32
    %19 = arith.cmpi eq, %arg1, %c0_i32_12 : i32
    %20 = arith.extui %19 : i1 to i32
    %c0_i32_13 = arith.constant 0 : i32
    %21 = arith.cmpi ne, %20, %c0_i32_13 : i32
    scf.if %21 {
      %c0_14 = arith.constant 0 : index
      %22 = memref.load %arg2[%c0_14] : memref<1xf32, #tpu.memory_space<smem>>
      %c0_15 = arith.constant 0 : index
      %c0_16 = arith.constant 0 : index
      %23 = vector.load %arg5[%c0_15, %c0_16] : memref<8x256xf32, #tpu.memory_space<vmem>>, vector<8x256xf32>
      %c0_17 = arith.constant 0 : index
      %c0_18 = arith.constant 0 : index
      %24 = vector.load %arg6[%c0_17, %c0_18] : memref<8x256xf32, #tpu.memory_space<vmem>>, vector<8x256xf32>
      %25 = tpu.iota {dimensions = array<i32: 0>} : vector<8x8xi32>
      %26 = tpu.iota {dimensions = array<i32: 1>} : vector<8x8xi32>
      %27 = arith.addi %25, %26 : vector<8x8xi32>
      %c7_i32 = arith.constant 7 : i32
      %28 = vector.broadcast %c7_i32 : i32 to vector<8x8xi32>
      %29 = arith.cmpi eq, %27, %28 : vector<8x8xi32>
      %cst_19 = arith.constant 1.000000e+00 : f32
      %cst_20 = arith.constant 0.000000e+00 : f32
      %30 = vector.broadcast %cst_19 : f32 to vector<8x8xf32>
      %31 = vector.broadcast %cst_20 : f32 to vector<8x8xf32>
      %32 = arith.select %29, %30, %31 : vector<8x8xi1>, vector<8x8xf32>
      %cst_21 = arith.constant dense<0.000000e+00> : vector<8x256xf32>
      %33 = tpu.matmul %32, %24, %cst_21 {dimension_numbers = #tpu.dot_dimension_numbers<[1], [0], [0], [1], [0, 0, 1, 1], [], []>} : vector<8x8xf32>, vector<8x256xf32>, vector<8x256xf32> -> vector<8x256xf32>
      %34 = arith.subf %33, %23 : vector<8x256xf32>
      %35 = vector.broadcast %22 : f32 to vector<8x256xf32>
      %36 = arith.mulf %35, %34 : vector<8x256xf32>
      %37 = arith.addf %23, %36 : vector<8x256xf32>
      %c0_22 = arith.constant 0 : index
      %c0_23 = arith.constant 0 : index
      %38 = vector.load %arg3[%c0_22, %c0_23] : memref<8x256xf32, #tpu.memory_space<vmem>>, vector<8x256xf32>
      %c0_24 = arith.constant 0 : index
      %c0_25 = arith.constant 0 : index
      %39 = vector.load %arg8[%c0_24, %c0_25] : memref<8x256xf32, #tpu.memory_space<vmem>>, vector<8x256xf32>
      %cst_26 = arith.constant 6.250000e-02 : f32
      %40 = vector.broadcast %cst_26 : f32 to vector<8x256xf32>
      %41 = arith.mulf %39, %40 : vector<8x256xf32>
      %cst_27 = arith.constant dense<0xFF800000> : vector<8xf32>
      %42 = vector.multi_reduction <maximumf>, %38, %cst_27 [1] : vector<8x256xf32> to vector<8xf32>
      %43 = vector.shape_cast %42 : vector<8xf32> to vector<8x1xf32>
      %44 = vector.broadcast %43 : vector<8x1xf32> to vector<8x256xf32>
      %45 = arith.subf %38, %44 : vector<8x256xf32>
      %46 = math.exp %45 : vector<8x256xf32>
      %cst_28 = arith.constant dense<0.000000e+00> : vector<8xf32>
      %47 = vector.multi_reduction <add>, %46, %cst_28 [1] : vector<8x256xf32> to vector<8xf32>
      %48 = vector.shape_cast %47 : vector<8xf32> to vector<8x1xf32>
      %49 = math.log %48 : vector<8x1xf32>
      %50 = vector.broadcast %49 : vector<8x1xf32> to vector<8x256xf32>
      %51 = arith.subf %45, %50 : vector<8x256xf32>
      %cst_29 = arith.constant 0.000000e+00 : f32
      %52 = vector.broadcast %cst_29 : f32 to vector<8x256xf32>
      %53 = arith.subf %52, %37 : vector<8x256xf32>
      %54 = arith.mulf %53, %51 : vector<8x256xf32>
      %55 = vector.shape_cast %54 : vector<8x256xf32> to vector<1x8x256xf32>
      %cst_30 = arith.constant dense<0.000000e+00> : vector<1xf32>
      %56 = vector.multi_reduction <add>, %55, %cst_30 [1, 2] : vector<1x8x256xf32> to vector<1xf32>
      %57 = vector.shape_cast %56 : vector<1xf32> to vector<1x1x1xf32>
      %58 = vector.extract %57[0, 0, 0] : f32 from vector<1x1x1xf32>
      %cst_31 = arith.constant 1.000000e+00 : f32
      %59 = arith.mulf %cst_31, %58 : f32
      %cst_32 = arith.constant dense<0xFF800000> : vector<8xf32>
      %60 = vector.multi_reduction <maximumf>, %41, %cst_32 [1] : vector<8x256xf32> to vector<8xf32>
      %61 = vector.shape_cast %60 : vector<8xf32> to vector<8x1xf32>
      %62 = vector.broadcast %61 : vector<8x1xf32> to vector<8x256xf32>
      %63 = arith.subf %41, %62 : vector<8x256xf32>
      %64 = math.exp %63 : vector<8x256xf32>
      %cst_33 = arith.constant dense<0.000000e+00> : vector<8xf32>
      %65 = vector.multi_reduction <add>, %64, %cst_33 [1] : vector<8x256xf32> to vector<8xf32>
      %66 = vector.shape_cast %65 : vector<8xf32> to vector<8x1xf32>
      %67 = math.log %66 : vector<8x1xf32>
      %68 = vector.broadcast %67 : vector<8x1xf32> to vector<8x256xf32>
      %69 = arith.subf %63, %68 : vector<8x256xf32>
      %cst_34 = arith.constant 0.000000e+00 : f32
      %70 = vector.broadcast %cst_34 : f32 to vector<8x256xf32>
      %71 = arith.subf %70, %23 : vector<8x256xf32>
      %72 = arith.mulf %71, %69 : vector<8x256xf32>
      %73 = vector.shape_cast %72 : vector<8x256xf32> to vector<1x8x256xf32>
      %cst_35 = arith.constant dense<0.000000e+00> : vector<1xf32>
      %74 = vector.multi_reduction <add>, %73, %cst_35 [1, 2] : vector<1x8x256xf32> to vector<1xf32>
      %75 = vector.shape_cast %74 : vector<1xf32> to vector<1x1x1xf32>
      %76 = vector.extract %75[0, 0, 0] : f32 from vector<1x1x1xf32>
      %cst_36 = arith.constant 1.000000e+00 : f32
      %77 = arith.mulf %cst_36, %76 : f32
      %78 = arith.addf %59, %77 : f32
      %79 = vector.broadcast %78 : f32 to vector<1x8x128xf32>
      %c0_37 = arith.constant 0 : index
      %c0_38 = arith.constant 0 : index
      %c0_39 = arith.constant 0 : index
      %80 = vector.load %arg7[%c0_37, %c0_38, %c0_39] : memref<1x8x128xf32, #tpu.memory_space<vmem>>, vector<1x8x128xf32>
      tpu.vector_store %arg7[%c0_37, %c0_38, %c0_39], %79 {strides = array<i32>} : memref<1x8x128xf32, #tpu.memory_space<vmem>>, vector<1x8x128xf32>,
    } else {
    }
    return
  }
  func.func @transform_0(%arg0: i32, %arg1: i32) -> i32 {
    %c0_i32 = arith.constant 0 : i32
    %c0_i32_0 = arith.constant 0 : i32
    return %c0_i32 : i32
  }
  func.func @transform_1(%arg0: i32, %arg1: i32) -> (i32, i32) {
    %c0_i32 = arith.constant 0 : i32
    %c0_i32_0 = arith.constant 0 : i32
    return %arg0, %c0_i32 : i32, i32
  }
  func.func @transform_2(%arg0: i32, %arg1: i32) -> (i32, i32, i32) {
    %c0_i32 = arith.constant 0 : i32
    %c0_i32_0 = arith.constant 0 : i32
    return %arg0, %arg1, %c0_i32 : i32, i32, i32
  }
  func.func @transform_3(%arg0: i32, %arg1: i32) -> (i32, i32) {
    %c0_i32 = arith.constant 0 : i32
    %c0_i32_0 = arith.constant 0 : i32
    return %arg0, %c0_i32 : i32, i32
  }
  func.func @transform_4(%arg0: i32, %arg1: i32) -> (i32, i32) {
    %c1_i32 = arith.constant 1 : i32
    %0 = arith.subi %c1_i32, %arg0 : i32
    %c0_i32 = arith.constant 0 : i32
    %c0_i32_0 = arith.constant 0 : i32
    return %0, %c0_i32 : i32, i32
  }
  func.func @transform_5(%arg0: i32, %arg1: i32) -> (i32, i32, i32) {
    %c0_i32 = arith.constant 0 : i32
    %c0_i32_0 = arith.constant 0 : i32
    %c0_i32_1 = arith.constant 0 : i32
    return %arg0, %c0_i32, %c0_i32_0 : i32, i32, i32
  }
}

</mosaic_0001>

<llo_original>
// kernel: tpu_custom_call.1
$region0: #{tpu_custom_call.1}
  #allocation0 [shape = 'u32[]', space=smem, size = 0x4, offset = 0x4, fixed_abs, tag = 'smem constant byte address 0x4 - core index']
  #allocation1 [shape = 'u32[72,128]{1,0:T(1,128)}', space=vmem, size = 0x9000, scoped, tag = 'internal scratch']
  #allocation2 [shape = 'f32[8,256]{1,0:T(8,128)}', space=vmem, size = 0x2000, scoped, tag = 'scratch operand']
  #allocation3 [shape = 'f32[1]{0:T(128)S(6)}', space=smem, size = 0x200, scoped, tag = 'scoped memory for tpu_custom_call.1']
  %s0 = inlined_call_operand.<no memory space> [shape: f32[1], index: 0, kind: input, shape index: {}]
  %s1 = inlined_call_operand.hbm [shape: f32[16,256], index: 1, kind: input, shape index: {}]
  %s2 = inlined_call_operand.hbm [shape: f32[16,16,256], index: 2, kind: input, shape index: {}]
  %s3 = inlined_call_operand.hbm [shape: f32[16,256], index: 3, kind: input, shape index: {}]
  %s4 = inlined_call_operand.hbm [shape: f32[16,256], index: 4, kind: input, shape index: {}]
  %s5 = inlined_call_operand.hbm [shape: f32[2,8,128], index: 5, kind: output, shape index: {}]
  %s6 = sld [smem:[#allocation0]]
  $region77: #{tpu_custom_call.1} parent=0
    _
  %s8 = ssub.s32 1, %s6
  %s9 = scalar_select 0, %s8, %s6
  %10 = sst [smem:[#allocation3]] %s0
  $region1: #{tpu_custom_call.1} parent=0
    #allocation4 [shape = 'u8[16384]{0}', space=vmem, size = 0x4000, scoped, tag = 'input window, operand 1']
    #allocation5 [shape = 's32[2]{0}', space=sflag, size = 0x8, scoped, tag = 'scoped memory for tpu_custom_call.1']
    #allocation6 [shape = 's32[2]{0}', space=sflag, size = 0x8, scoped, tag = 'scoped memory for tpu_custom_call.1']
    #allocation7 [shape = 'u8[262144]{0}', space=vmem, size = 0x40000, scoped, tag = 'input window, operand 2']
    #allocation8 [shape = 's32[2]{0}', space=sflag, size = 0x8, scoped, tag = 'scoped memory for tpu_custom_call.1']
    #allocation9 [shape = 'u8[16384]{0}', space=vmem, size = 0x4000, scoped, tag = 'input window, operand 3']
    #allocation10 [shape = 'u8[16384]{0}', space=vmem, size = 0x4000, scoped, tag = 'input window, operand 4']
    #allocation11 [shape = 's32[2]{0}', space=sflag, size = 0x8, scoped, tag = 'scoped memory for tpu_custom_call.1']
    #allocation12 [shape = 'u8[8192]{0}', space=vmem, size = 0x2000, scoped, tag = 'output window, operand 0']
    %11 = vsyncpa [#allocation5], 0
    %s12 = scalar_lea.sflag [#allocation5], 1
    %13 = vsyncpa %s12, 0
    %14 = vsyncpa [#allocation8], 0
    %s15 = scalar_lea.sflag [#allocation8], 1
    %16 = vsyncpa %s15, 0
    %17 = vsyncpa [#allocation11], 0
    %s18 = scalar_lea.sflag [#allocation11], 1
    %19 = vsyncpa %s18, 0
    %20 = vsyncpa [#allocation6], 0
    %s21 = scalar_lea.sflag [#allocation6], 1
    %22 = vsyncpa %s21, 0
    loop: start=0, step=1, limit=4
    $region2: #{tpu_custom_call.1} parent=1 // loop_pre_header
      _
    $region3: #{tpu_custom_call.1} parent=1 // loop_header
      %s24 = sphi 0, %s28
      %p25 = scmp.ge.s32.totalorder %s24, 4
      %s31 = sphi 0, %s43
      %s32 = sphi 0, %s39
      %s33 = sphi 0, %s31
      %s34 = sphi 0, %s32
      %s35 = sphi 0, %s33
      %s36 = sphi 0, %s34
      %s44 = sphi 0, %s44
      %s46 = sphi 0, %s44
      %s47 = sphi 0, %s46
      %s61 = sphi 0, %s47
      %s67 = sphi 0, %s69
      %s70 = sphi 0, %s67
      %s71 = sphi 0, %s70
      %s87 = sphi 0, %s71
      %s95 = sphi 0, %s97
      %s98 = sphi 0, %s95
      %s99 = sphi 0, %s98
      %s115 = sphi 0, %s99
      %s121 = sphi 0, %s123
      %s124 = sphi 0, %s121
      %s125 = sphi 0, %s124
      %s141 = sphi 0, %s125
      %s149 = sphi 0, %s151
      %s152 = sphi 0, %s149
      %s153 = sphi 0, %s152
      %s169 = sphi 0, %s153
      %s175 = sphi 0, %s177
      %s178 = sphi 0, %s175
      %s179 = sphi 0, %s178
      %s195 = sphi 0, %s179
    $region4: #{tpu_custom_call.1} parent=1 // loop_header_branch
      %27 = sbr.rel (%p25) target = $region8
    $region5: #{tpu_custom_call.1} parent=1 // loop_body
      %s29 = ssub.s32 %s24, 1
      %s30 = ssub.s32 %s24, 2
      %s37 = sadd.s32 1, %s32
      %p38 = scmp.ge.s32.totalorder %s37, 1
      %s39 = scalar_select %p38, 0, %s37
      %s40 = sadd.s32 1, %s31
      %s41 = scalar_select %p38, %s40, %s31
      %p42 = scmp.ge.s32.totalorder %s41, 2
      %s43 = scalar_select %p42, 0, %s41
      %s45 = sadd.s32 %s44, 1
      %p48 = scmp.eq.s32.totalorder %s24, 1
      %p49 = scmp.ne.s32.totalorder %s44, %s46
      %p50 = scmp.eq.s32.totalorder %s24, 0
      %p51 = por %p49, %p50
      %p52 = scmp.ne.s32.totalorder %s44, %s46
      %p53 = scmp.eq.s32.totalorder %s29, 1
      %p54 = por %p52, %p53
      %p55 = scmp.ne.s32.totalorder %s46, %s47
      %p56 = scmp.eq.s32.totalorder %s29, 0
      %p57 = por %p55, %p56
      %p58 = scmp.ne.s32.totalorder %s46, %s47
      %p59 = scmp.eq.s32.totalorder %s30, 1
      %p60 = por %p58, %p59
      %p62 = scmp.ne.s32.totalorder %s47, %s61
      %p63 = scmp.eq.s32.totalorder %s30, 0
      %p64 = por %p62, %p63
      %s65 = ssub.s32 %s31, %s43
      %p66 = scmp.eq.s32.totalorder %s65, 0
      %s68 = sadd.s32 %s67, 1
      %s69 = scalar_select %p66, %s67, %s68
      %p72 = pneg %p66
      %p73 = scmp.eq.s32.totalorder %s24, 1
      %p74 = por %p72, %p73
      %p75 = scmp.ne.s32.totalorder %s67, %s70
      %p76 = scmp.eq.s32.totalorder %s24, 0
      %p77 = por %p75, %p76
      %p78 = scmp.ne.s32.totalorder %s67, %s70
      %p79 = scmp.eq.s32.totalorder %s29, 1
      %p80 = por %p78, %p79
      %p81 = scmp.ne.s32.totalorder %s70, %s71
      %p82 = scmp.eq.s32.totalorder %s29, 0
      %p83 = por %p81, %p82
      %p84 = scmp.ne.s32.totalorder %s70, %s71
      %p85 = scmp.eq.s32.totalorder %s30, 1
      %p86 = por %p84, %p85
      %p88 = scmp.ne.s32.totalorder %s71, %s87
      %p89 = scmp.eq.s32.totalorder %s30, 0
      %p90 = por %p88, %p89
      %s91 = ssub.s32 %s31, %s43
      %s92 = ssub.s32 %s32, %s39
      %s93 = sor.u32 %s91, %s92
      %p94 = scmp.eq.s32.totalorder %s93, 0
      %s96 = sadd.s32 %s95, 1
      %s97 = scalar_select %p94, %s95, %s96
      %p100 = pneg %p94
      %p101 = scmp.eq.s32.totalorder %s24, 1
      %p102 = por %p100, %p101
      %p103 = scmp.ne.s32.totalorder %s95, %s98
      %p104 = scmp.eq.s32.totalorder %s24, 0
      %p105 = por %p103, %p104
      %p106 = scmp.ne.s32.totalorder %s95, %s98
      %p107 = scmp.eq.s32.totalorder %s29, 1
      %p108 = por %p106, %p107
      %p109 = scmp.ne.s32.totalorder %s98, %s99
      %p110 = scmp.eq.s32.totalorder %s29, 0
      %p111 = por %p109, %p110
      %p112 = scmp.ne.s32.totalorder %s98, %s99
      %p113 = scmp.eq.s32.totalorder %s30, 1
      %p114 = por %p112, %p113
      %p116 = scmp.ne.s32.totalorder %s99, %s115
      %p117 = scmp.eq.s32.totalorder %s30, 0
      %p118 = por %p116, %p117
      %s119 = ssub.s32 %s31, %s43
      %p120 = scmp.eq.s32.totalorder %s119, 0
      %s122 = sadd.s32 %s121, 1
      %s123 = scalar_select %p120, %s121, %s122
      %p126 = pneg %p120
      %p127 = scmp.eq.s32.totalorder %s24, 1
      %p128 = por %p126, %p127
      %p129 = scmp.ne.s32.totalorder %s121, %s124
      %p130 = scmp.eq.s32.totalorder %s24, 0
      %p131 = por %p129, %p130
      %p132 = scmp.ne.s32.totalorder %s121, %s124
      %p133 = scmp.eq.s32.totalorder %s29, 1
      %p134 = por %p132, %p133
      %p135 = scmp.ne.s32.totalorder %s124, %s125
      %p136 = scmp.eq.s32.totalorder %s29, 0
      %p137 = por %p135, %p136
      %p138 = scmp.ne.s32.totalorder %s124, %s125
      %p139 = scmp.eq.s32.totalorder %s30, 1
      %p140 = por %p138, %p139
      %p142 = scmp.ne.s32.totalorder %s125, %s141
      %p143 = scmp.eq.s32.totalorder %s30, 0
      %p144 = por %p142, %p143
      %s145 = ssub.s32 1, %s31
      %s146 = ssub.s32 1, %s43
      %s147 = ssub.s32 %s145, %s146
      %p148 = scmp.eq.s32.totalorder %s147, 0
      %s150 = sadd.s32 %s149, 1
      %s151 = scalar_select %p148, %s149, %s150
      %p154 = pneg %p148
      %p155 = scmp.eq.s32.totalorder %s24, 1
      %p156 = por %p154, %p155
      %p157 = scmp.ne.s32.totalorder %s149, %s152
      %p158 = scmp.eq.s32.totalorder %s24, 0
      %p159 = por %p157, %p158
      %p160 = scmp.ne.s32.totalorder %s149, %s152
      %p161 = scmp.eq.s32.totalorder %s29, 1
      %p162 = por %p160, %p161
      %p163 = scmp.ne.s32.totalorder %s152, %s153
      %p164 = scmp.eq.s32.totalorder %s29, 0
      %p165 = por %p163, %p164
      %p166 = scmp.ne.s32.totalorder %s152, %s153
      %p167 = scmp.eq.s32.totalorder %s30, 1
      %p168 = por %p166, %p167
      %p170 = scmp.ne.s32.totalorder %s153, %s169
      %p171 = scmp.eq.s32.totalorder %s30, 0
      %p172 = por %p170, %p171
      %s173 = ssub.s32 %s31, %s43
      %p174 = scmp.eq.s32.totalorder %s173, 0
      %s176 = sadd.s32 %s175, 1
      %s177 = scalar_select %p174, %s175, %s176
      %p180 = pneg %p174
      %p181 = scmp.eq.s32.totalorder %s24, 1
      %p182 = por %p180, %p181
      %p183 = scmp.ne.s32.totalorder %s175, %s178
      %p184 = scmp.eq.s32.totalorder %s24, 0
      %p185 = por %p183, %p184
      %p186 = scmp.ne.s32.totalorder %s175, %s178
      %p187 = scmp.eq.s32.totalorder %s29, 1
      %p188 = por %p186, %p187
      %p189 = scmp.ne.s32.totalorder %s178, %s179
      %p190 = scmp.eq.s32.totalorder %s29, 0
      %p191 = por %p189, %p190
      %p192 = scmp.ne.s32.totalorder %s178, %s179
      %p193 = scmp.eq.s32.totalorder %s30, 1
      %p194 = por %p192, %p193
      %p196 = scmp.ne.s32.totalorder %s179, %s195
      %p197 = scmp.eq.s32.totalorder %s30, 0
      %p198 = por %p196, %p197
      %p199 = scmp.le.s32.totalorder 1, %s24
      %p200 = scmp.lt.s32.totalorder %s24, 3
      %p201 = pnand %p199, %p200
      %p202 = pneg %p201
      // Predicated region
      $region9: #{tpu_custom_call.1} parent=5 // pred_check
        _
      $region10: #{tpu_custom_call.1} parent=5 // pred_check_branch
        %204 = sbr.rel (%p201) target = $region12
      $region11: #{tpu_custom_call.1} parent=5 // pred_region
        %s205 = ssub.s32 %s24, 1
        // Predicated region
        $region13: #{tpu_custom_call.1} parent=11 // pred_check
          %p206 = pneg %p57
        $region14: #{tpu_custom_call.1} parent=11 // pred_check_branch
          %208 = sbr.rel (%p206) target = $region16
        $region15: #{tpu_custom_call.1} parent=11 // pred_region
          _
        $region16: #{tpu_custom_call.1} parent=11 // pred_fallthru
          _
      $region12: #{tpu_custom_call.1} parent=5 // pred_fallthru
        _
      %p209 = scmp.lt.s32.totalorder %s24, 2
      // Predicated region
      $region17: #{tpu_custom_call.1} parent=5 // pred_check
        %p210 = pneg %p209
      $region18: #{tpu_custom_call.1} parent=5 // pred_check_branch
        %212 = sbr.rel (%p210) target = $region20
      $region19: #{tpu_custom_call.1} parent=5 // pred_region
        // Predicated region
        $region21: #{tpu_custom_call.1} parent=19 // pred_check
          %p213 = pneg %p77
        $region22: #{tpu_custom_call.1} parent=19 // pred_check_branch
          %215 = sbr.rel (%p213) target = $region24
        $region23: #{tpu_custom_call.1} parent=19 // pred_region
          %s216 = sand.u32 %s67, 1
          %s217 = scalar_lea.sflag [#allocation5], %s216
          %s218 = sand.u32 %s67, 1
          %s219 = smul.addr %s218, 16
          %s220 = scalar_lea.vmem [#allocation4], %s219
          %222 = vsyncadd %s217, 0
          %s223 = smul.addr %s31, 2
          %s224 = smul.addr %s223, 8
          %s225 = scalar_lea.hbm %s1, %s224
          %s227 = sshll.u32 %s225, 4
          %s228 = int_to_ptr.hbm [resolvable:$true] %s227
          %s229 = sshll.u32 %s220, 4
          %s230 = int_to_ptr.vmem [resolvable:$true] %s229
          %232 = dma.hbm_to_vmem [thread:$0]  %s228, 256, %s230, %s217
        $region24: #{tpu_custom_call.1} parent=19 // pred_fallthru
          _
        // Predicated region
        $region25: #{tpu_custom_call.1} parent=19 // pred_check
          %p233 = pneg %p105
        $region26: #{tpu_custom_call.1} parent=19 // pred_check_branch
          %235 = sbr.rel (%p233) target = $region28
        $region27: #{tpu_custom_call.1} parent=19 // pred_region
          %s236 = sand.u32 %s24, 1
          %s237 = scalar_lea.sflag [#allocation8], %s236
          %s238 = sand.u32 %s95, 1
          %s239 = smul.addr %s238, 256
          %s240 = scalar_lea.vmem [#allocation7], %s239
          %s241 = smul.u32 8, %s31
          %s242 = smul.u32 2, %s32
          %244 = vsyncadd %s237, 0
          %s245 = smul.addr %s242, 2
          %s246 = smul.addr %s241, 4
          %s247 = sadd.s32 %s245, %s246
          %s248 = smul.addr %s247, 8
          %s249 = scalar_lea.hbm %s2, %s248
          %s250 = sshll.u32 %s249, 4
          %s251 = int_to_ptr.hbm [resolvable:$true] %s250
          %s252 = sshll.u32 %s240, 4
          %s253 = int_to_ptr.vmem [resolvable:$true] %s252
          %258 = dma.hbm_to_vmem [thread:$0]  %s251, 4096, %s253, %s237, 256, 256, 16
        $region28: #{tpu_custom_call.1} parent=19 // pred_fallthru
          _
        // Predicated region
        $region29: #{tpu_custom_call.1} parent=19 // pred_check
          %p259 = pneg %p131
        $region30: #{tpu_custom_call.1} parent=19 // pred_check_branch
          %261 = sbr.rel (%p259) target = $region32
        $region31: #{tpu_custom_call.1} parent=19 // pred_region
          %s262 = sand.u32 %s24, 1
          %s263 = scalar_lea.sflag [#allocation8], %s262
          %s264 = sand.u32 %s121, 1
          %s265 = smul.addr %s264, 16
          %s266 = scalar_lea.vmem [#allocation9], %s265
          %268 = vsyncadd %s263, 0
          %s269 = smul.addr %s31, 2
          %s270 = smul.addr %s269, 8
          %s271 = scalar_lea.hbm %s3, %s270
          %s273 = sshll.u32 %s271, 4
          %s274 = int_to_ptr.hbm [resolvable:$true] %s273
          %s275 = sshll.u32 %s266, 4
          %s276 = int_to_ptr.vmem [resolvable:$true] %s275
          %278 = dma.hbm_to_vmem [thread:$0]  %s274, 256, %s276, %s263
        $region32: #{tpu_custom_call.1} parent=19 // pred_fallthru
          _
        // Predicated region
        $region33: #{tpu_custom_call.1} parent=19 // pred_check
          %p279 = pneg %p159
        $region34: #{tpu_custom_call.1} parent=19 // pred_check_branch
          %281 = sbr.rel (%p279) target = $region36
        $region35: #{tpu_custom_call.1} parent=19 // pred_region
          %s282 = sand.u32 %s149, 1
          %s283 = scalar_lea.sflag [#allocation11], %s282
          %s284 = sand.u32 %s149, 1
          %s285 = smul.addr %s284, 16
          %s286 = scalar_lea.vmem [#allocation10], %s285
          %s287 = ssub.s32 1, %s31
          %289 = vsyncadd %s283, 0
          %s290 = smul.addr %s287, 2
          %s291 = smul.addr %s290, 8
          %s292 = scalar_lea.hbm %s4, %s291
          %s294 = sshll.u32 %s292, 4
          %s295 = int_to_ptr.hbm [resolvable:$true] %s294
          %s296 = sshll.u32 %s286, 4
          %s297 = int_to_ptr.vmem [resolvable:$true] %s296
          %299 = dma.hbm_to_vmem [thread:$0]  %s295, 256, %s297, %s283
        $region36: #{tpu_custom_call.1} parent=19 // pred_fallthru
          _
      $region20: #{tpu_custom_call.1} parent=5 // pred_fallthru
        _
      %p300 = scmp.le.s32.totalorder 1, %s24
      %p301 = scmp.lt.s32.totalorder %s24, 3
      %p302 = pnand %p300, %p301
      %p303 = pneg %p302
      // Predicated region
      $region37: #{tpu_custom_call.1} parent=5 // pred_check
        _
      $region38: #{tpu_custom_call.1} parent=5 // pred_check_branch
        %305 = sbr.rel (%p302) target = $region40
      $region39: #{tpu_custom_call.1} parent=5 // pred_region
        %s306 = ssub.s32 %s24, 1
        %s307 = sand.u32 %s70, 1
        %s308 = scalar_lea.sflag [#allocation5], %s307
        %s309 = sand.u32 %s70, 1
        %s310 = smul.addr %s309, 16
        %s311 = scalar_lea.vmem [#allocation4], %s310
        // Predicated region
        $region41: #{tpu_custom_call.1} parent=39 // pred_check
          %p312 = pneg %p83
        $region42: #{tpu_custom_call.1} parent=39 // pred_check_branch
          %314 = sbr.rel (%p312) target = $region44
        $region43: #{tpu_custom_call.1} parent=39 // pred_region
          %316 = dma.done %s308, 256
        $region44: #{tpu_custom_call.1} parent=39 // pred_fallthru
          _
        %s317 = sand.u32 %s29, 1
        %s318 = scalar_lea.sflag [#allocation8], %s317
        %s319 = sand.u32 %s98, 1
        %s320 = smul.addr %s319, 256
        %s321 = scalar_lea.vmem [#allocation7], %s320
        // Predicated region
        $region45: #{tpu_custom_call.1} parent=39 // pred_check
          %p322 = pneg %p111
        $region46: #{tpu_custom_call.1} parent=39 // pred_check_branch
          %324 = sbr.rel (%p322) target = $region48
        $region47: #{tpu_custom_call.1} parent=39 // pred_region
          %326 = dma.done %s318, 4096
        $region48: #{tpu_custom_call.1} parent=39 // pred_fallthru
          _
        %s327 = sand.u32 %s29, 1
        %s328 = scalar_lea.sflag [#allocation8], %s327
        %s329 = sand.u32 %s124, 1
        %s330 = smul.addr %s329, 16
        %s331 = scalar_lea.vmem [#allocation9], %s330
        // Predicated region
        $region49: #{tpu_custom_call.1} parent=39 // pred_check
          %p332 = pneg %p137
        $region50: #{tpu_custom_call.1} parent=39 // pred_check_branch
          %334 = sbr.rel (%p332) target = $region52
        $region51: #{tpu_custom_call.1} parent=39 // pred_region
          %336 = dma.done %s328, 256
        $region52: #{tpu_custom_call.1} parent=39 // pred_fallthru
          _
        %s337 = sand.u32 %s152, 1
        %s338 = scalar_lea.sflag [#allocation11], %s337
        %s339 = sand.u32 %s152, 1
        %s340 = smul.addr %s339, 16
        %s341 = scalar_lea.vmem [#allocation10], %s340
        // Predicated region
        $region53: #{tpu_custom_call.1} parent=39 // pred_check
          %p342 = pneg %p165
        $region54: #{tpu_custom_call.1} parent=39 // pred_check_branch
          %344 = sbr.rel (%p342) target = $region56
        $region55: #{tpu_custom_call.1} parent=39 // pred_region
          %346 = dma.done %s338, 256
        $region56: #{tpu_custom_call.1} parent=39 // pred_fallthru
          _
        %p347 = pneg %p57
        %p348 = pneg %p54
        %s349 = sand.u32 %s70, 1
        %s350 = scalar_lea.sflag [#allocation5], %s349
        %s351 = sand.u32 %s70, 1
        %s352 = smul.addr %s351, 16
        %s353 = scalar_lea.vmem [#allocation4], %s352
        %p354 = pneg %p83
        %p355 = pneg %p80
        %s356 = sand.u32 %s29, 1
        %s357 = scalar_lea.sflag [#allocation8], %s356
        %s358 = sand.u32 %s98, 1
        %s359 = smul.addr %s358, 256
        %s360 = scalar_lea.vmem [#allocation7], %s359
        %p361 = pneg %p111
        %p362 = pneg %p108
        %s363 = sand.u32 %s29, 1
        %s364 = scalar_lea.sflag [#allocation8], %s363
        %s365 = sand.u32 %s124, 1
        %s366 = smul.addr %s365, 16
        %s367 = scalar_lea.vmem [#allocation9], %s366
        %p368 = pneg %p137
        %p369 = pneg %p134
        %s370 = sand.u32 %s152, 1
        %s371 = scalar_lea.sflag [#allocation11], %s370
        %s372 = sand.u32 %s152, 1
        %s373 = smul.addr %s372, 16
        %s374 = scalar_lea.vmem [#allocation10], %s373
        %p375 = pneg %p165
        %p376 = pneg %p162
        %p377 = pneg %p191
        %p378 = pneg %p188
        %s379 = sand.u32 %s178, 1
        %s380 = scalar_lea.sflag [#allocation6], %s379
        %s381 = sand.u32 %s178, 1
        %s382 = smul.addr %s381, 8
        %s383 = scalar_lea.vmem [#allocation12], %s382
        %s384 = smul.u32 8, %s33
        %s385 = smul.u32 2, %s34
        %s386 = ssub.s32 1, %s33
        %p387 = scmp.eq.s32.totalorder %s34, 0
        // Predicated region
        $region57: #{tpu_custom_call.1} parent=39 // pred_check
          %p388 = pneg %p387
        $region58: #{tpu_custom_call.1} parent=39 // pred_check_branch
          %390 = sbr.rel (%p388) target = $region60
        $region59: #{tpu_custom_call.1} parent=39 // pred_region
          %391 = vst [vmem:[#allocation2] sm:$0xff] 0.0
          %392 = vst [vmem:[#allocation2 + $0x8] sm:$0xff] 0.0
        $region60: #{tpu_custom_call.1} parent=39 // pred_fallthru
          _
        %s393 = smul.u32 0, 2
        %s394 = smul.addr %s393, 8
        %s395 = scalar_lea.vmem %s321, %s394 [#allocation7]
        %v396 = vld [vmem:[%s395] sm:$0xff]
        %v397 = vld [vmem:[%s395 + $0x8] sm:$0xff]
        %v398 = vld [vmem:[%s395 + $0x20] sm:$0xff]
        %v399 = vld [vmem:[%s395 + $0x28] sm:$0xff]
        %v400 = vld [vmem:[%s395 + $0x40] sm:$0xff]
        %v401 = vld [vmem:[%s395 + $0x48] sm:$0xff]
        %v402 = vld [vmem:[%s395 + $0x60] sm:$0xff]
        %v403 = vld [vmem:[%s395 + $0x68] sm:$0xff]
        %v404 = vld [vmem:[%s395 + $0x80] sm:$0xff]
        %v405 = vld [vmem:[%s395 + $0x88] sm:$0xff]
        %v406 = vld [vmem:[%s395 + $0xa0] sm:$0xff]
        %v407 = vld [vmem:[%s395 + $0xa8] sm:$0xff]
        %v408 = vld [vmem:[%s395 + $0xc0] sm:$0xff]
        %v409 = vld [vmem:[%s395 + $0xc8] sm:$0xff]
        %v410 = vld [vmem:[%s395 + $0xe0] sm:$0xff]
        %v411 = vld [vmem:[%s395 + $0xe8] sm:$0xff]
        %v412 = vrot.slane %v396, 4
        %v413 = vadd.f32 %v396, %v412
        %v414 = vrot.slane %v413, 2
        %v415 = vadd.f32 %v413, %v414
        %v416 = vrot.slane %v415, 1
        %v417 = vadd.f32 %v415, %v416
        %v418 = vrot.slane %v397, 4
        %v419 = vadd.f32 %v397, %v418
        %v420 = vrot.slane %v419, 2
        %v421 = vadd.f32 %v419, %v420
        %v422 = vrot.slane %v421, 1
        %v423 = vadd.f32 %v421, %v422
        %v424 = vrot.slane %v398, 4
        %v425 = vadd.f32 %v398, %v424
        %v426 = vrot.slane %v425, 2
        %v427 = vadd.f32 %v425, %v426
        %v428 = vrot.slane %v427, 1
        %v429 = vadd.f32 %v427, %v428
        %v430 = vrot.slane %v399, 4
        %v431 = vadd.f32 %v399, %v430
        %v432 = vrot.slane %v431, 2
        %v433 = vadd.f32 %v431, %v432
        %v434 = vrot.slane %v433, 1
        %v435 = vadd.f32 %v433, %v434
        %v436 = vrot.slane %v400, 4
        %v437 = vadd.f32 %v400, %v436
        %v438 = vrot.slane %v437, 2
        %v439 = vadd.f32 %v437, %v438
        %v440 = vrot.slane %v439, 1
        %v441 = vadd.f32 %v439, %v440
        %v442 = vrot.slane %v401, 4
        %v443 = vadd.f32 %v401, %v442
        %v444 = vrot.slane %v443, 2
        %v445 = vadd.f32 %v443, %v444
        %v446 = vrot.slane %v445, 1
        %v447 = vadd.f32 %v445, %v446
        %v448 = vrot.slane %v402, 4
        %v449 = vadd.f32 %v402, %v448
        %v450 = vrot.slane %v449, 2
        %v451 = vadd.f32 %v449, %v450
        %v452 = vrot.slane %v451, 1
        %v453 = vadd.f32 %v451, %v452
        %v454 = vrot.slane %v403, 4
        %v455 = vadd.f32 %v403, %v454
        %v456 = vrot.slane %v455, 2
        %v457 = vadd.f32 %v455, %v456
        %v458 = vrot.slane %v457, 1
        %v459 = vadd.f32 %v457, %v458
        %v460 = vrot.slane %v404, 4
        %v461 = vadd.f32 %v404, %v460
        %v462 = vrot.slane %v461, 2
        %v463 = vadd.f32 %v461, %v462
        %v464 = vrot.slane %v463, 1
        %v465 = vadd.f32 %v463, %v464
        %v466 = vrot.slane %v405, 4
        %v467 = vadd.f32 %v405, %v466
        %v468 = vrot.slane %v467, 2
        %v469 = vadd.f32 %v467, %v468
        %v470 = vrot.slane %v469, 1
        %v471 = vadd.f32 %v469, %v470
        %v472 = vrot.slane %v406, 4
        %v473 = vadd.f32 %v406, %v472
        %v474 = vrot.slane %v473, 2
        %v475 = vadd.f32 %v473, %v474
        %v476 = vrot.slane %v475, 1
        %v477 = vadd.f32 %v475, %v476
        %v478 = vrot.slane %v407, 4
        %v479 = vadd.f32 %v407, %v478
        %v480 = vrot.slane %v479, 2
        %v481 = vadd.f32 %v479, %v480
        %v482 = vrot.slane %v481, 1
        %v483 = vadd.f32 %v481, %v482
        %v484 = vrot.slane %v408, 4
        %v485 = vadd.f32 %v408, %v484
        %v486 = vrot.slane %v485, 2
        %v487 = vadd.f32 %v485, %v486
        %v488 = vrot.slane %v487, 1
        %v489 = vadd.f32 %v487, %v488
        %v490 = vrot.slane %v409, 4
        %v491 = vadd.f32 %v409, %v490
        %v492 = vrot.slane %v491, 2
        %v493 = vadd.f32 %v491, %v492
        %v494 = vrot.slane %v493, 1
        %v495 = vadd.f32 %v493, %v494
        %v496 = vrot.slane %v410, 4
        %v497 = vadd.f32 %v410, %v496
        %v498 = vrot.slane %v497, 2
        %v499 = vadd.f32 %v497, %v498
        %v500 = vrot.slane %v499, 1
        %v501 = vadd.f32 %v499, %v500
        %v502 = vrot.slane %v411, 4
        %v503 = vadd.f32 %v411, %v502
        %v504 = vrot.slane %v503, 2
        %v505 = vadd.f32 %v503, %v504
        %v506 = vrot.slane %v505, 1
        %v507 = vadd.f32 %v505, %v506
        %v508 = vadd.f32 %v417, 0.0
        %v509 = vadd.f32 %v423, 0.0
        %v510 = vadd.f32 %v429, 0.0
        %v511 = vadd.f32 %v435, 0.0
        %v512 = vadd.f32 %v441, 0.0
        %v513 = vadd.f32 %v447, 0.0
        %v514 = vadd.f32 %v453, 0.0
        %v515 = vadd.f32 %v459, 0.0
        %v516 = vadd.f32 %v465, 0.0
        %v517 = vadd.f32 %v471, 0.0
        %v518 = vadd.f32 %v477, 0.0
        %v519 = vadd.f32 %v483, 0.0
        %v520 = vadd.f32 %v489, 0.0
        %v521 = vadd.f32 %v495, 0.0
        %v522 = vadd.f32 %v501, 0.0
        %v523 = vadd.f32 %v507, 0.0
        %s524 = smul.u32 1, 2
        %s525 = smul.addr %s524, 8
        %s526 = scalar_lea.vmem %s321, %s525 [#allocation7]
        %v527 = vld [vmem:[%s526] sm:$0xff]
        %v528 = vld [vmem:[%s526 + $0x8] sm:$0xff]
        %v529 = vld [vmem:[%s526 + $0x20] sm:$0xff]
        %v530 = vld [vmem:[%s526 + $0x28] sm:$0xff]
        %v531 = vld [vmem:[%s526 + $0x40] sm:$0xff]
        %v532 = vld [vmem:[%s526 + $0x48] sm:$0xff]
        %v533 = vld [vmem:[%s526 + $0x60] sm:$0xff]
        %v534 = vld [vmem:[%s526 + $0x68] sm:$0xff]
        %v535 = vld [vmem:[%s526 + $0x80] sm:$0xff]
        %v536 = vld [vmem:[%s526 + $0x88] sm:$0xff]
        %v537 = vld [vmem:[%s526 + $0xa0] sm:$0xff]
        %v538 = vld [vmem:[%s526 + $0xa8] sm:$0xff]
        %v539 = vld [vmem:[%s526 + $0xc0] sm:$0xff]
        %v540 = vld [vmem:[%s526 + $0xc8] sm:$0xff]
        %v541 = vld [vmem:[%s526 + $0xe0] sm:$0xff]
        %v542 = vld [vmem:[%s526 + $0xe8] sm:$0xff]
        %v543 = vrot.slane %v527, 4
        %v544 = vadd.f32 %v527, %v543
        %v545 = vrot.slane %v544, 2
        %v546 = vadd.f32 %v544, %v545
        %v547 = vrot.slane %v546, 1
        %v548 = vadd.f32 %v546, %v547
        %v549 = vrot.slane %v528, 4
        %v550 = vadd.f32 %v528, %v549
        %v551 = vrot.slane %v550, 2
        %v552 = vadd.f32 %v550, %v551
        %v553 = vrot.slane %v552, 1
        %v554 = vadd.f32 %v552, %v553
        %v555 = vrot.slane %v529, 4
        %v556 = vadd.f32 %v529, %v555
        %v557 = vrot.slane %v556, 2
        %v558 = vadd.f32 %v556, %v557
        %v559 = vrot.slane %v558, 1
        %v560 = vadd.f32 %v558, %v559
        %v561 = vrot.slane %v530, 4
        %v562 = vadd.f32 %v530, %v561
        %v563 = vrot.slane %v562, 2
        %v564 = vadd.f32 %v562, %v563
        %v565 = vrot.slane %v564, 1
        %v566 = vadd.f32 %v564, %v565
        %v567 = vrot.slane %v531, 4
        %v568 = vadd.f32 %v531, %v567
        %v569 = vrot.slane %v568, 2
        %v570 = vadd.f32 %v568, %v569
        %v571 = vrot.slane %v570, 1
        %v572 = vadd.f32 %v570, %v571
        %v573 = vrot.slane %v532, 4
        %v574 = vadd.f32 %v532, %v573
        %v575 = vrot.slane %v574, 2
        %v576 = vadd.f32 %v574, %v575
        %v577 = vrot.slane %v576, 1
        %v578 = vadd.f32 %v576, %v577
        %v579 = vrot.slane %v533, 4
        %v580 = vadd.f32 %v533, %v579
        %v581 = vrot.slane %v580, 2
        %v582 = vadd.f32 %v580, %v581
        %v583 = vrot.slane %v582, 1
        %v584 = vadd.f32 %v582, %v583
        %v585 = vrot.slane %v534, 4
        %v586 = vadd.f32 %v534, %v585
        %v587 = vrot.slane %v586, 2
        %v588 = vadd.f32 %v586, %v587
        %v589 = vrot.slane %v588, 1
        %v590 = vadd.f32 %v588, %v589
        %v591 = vrot.slane %v535, 4
        %v592 = vadd.f32 %v535, %v591
        %v593 = vrot.slane %v592, 2
        %v594 = vadd.f32 %v592, %v593
        %v595 = vrot.slane %v594, 1
        %v596 = vadd.f32 %v594, %v595
        %v597 = vrot.slane %v536, 4
        %v598 = vadd.f32 %v536, %v597
        %v599 = vrot.slane %v598, 2
        %v600 = vadd.f32 %v598, %v599
        %v601 = vrot.slane %v600, 1
        %v602 = vadd.f32 %v600, %v601
        %v603 = vrot.slane %v537, 4
        %v604 = vadd.f32 %v537, %v603
        %v605 = vrot.slane %v604, 2
        %v606 = vadd.f32 %v604, %v605
        %v607 = vrot.slane %v606, 1
        %v608 = vadd.f32 %v606, %v607
        %v609 = vrot.slane %v538, 4
        %v610 = vadd.f32 %v538, %v609
        %v611 = vrot.slane %v610, 2
        %v612 = vadd.f32 %v610, %v611
        %v613 = vrot.slane %v612, 1
        %v614 = vadd.f32 %v612, %v613
        %v615 = vrot.slane %v539, 4
        %v616 = vadd.f32 %v539, %v615
        %v617 = vrot.slane %v616, 2
        %v618 = vadd.f32 %v616, %v617
        %v619 = vrot.slane %v618, 1
        %v620 = vadd.f32 %v618, %v619
        %v621 = vrot.slane %v540, 4
        %v622 = vadd.f32 %v540, %v621
        %v623 = vrot.slane %v622, 2
        %v624 = vadd.f32 %v622, %v623
        %v625 = vrot.slane %v624, 1
        %v626 = vadd.f32 %v624, %v625
        %v627 = vrot.slane %v541, 4
        %v628 = vadd.f32 %v541, %v627
        %v629 = vrot.slane %v628, 2
        %v630 = vadd.f32 %v628, %v629
        %v631 = vrot.slane %v630, 1
        %v632 = vadd.f32 %v630, %v631
        %v633 = vrot.slane %v542, 4
        %v634 = vadd.f32 %v542, %v633
        %v635 = vrot.slane %v634, 2
        %v636 = vadd.f32 %v634, %v635
        %v637 = vrot.slane %v636, 1
        %v638 = vadd.f32 %v636, %v637
        %v639 = vadd.f32 %v508, %v548
        %v640 = vadd.f32 %v509, %v554
        %v641 = vadd.f32 %v510, %v560
        %v642 = vadd.f32 %v511, %v566
        %v643 = vadd.f32 %v512, %v572
        %v644 = vadd.f32 %v513, %v578
        %v645 = vadd.f32 %v514, %v584
        %v646 = vadd.f32 %v515, %v590
        %v647 = vadd.f32 %v516, %v596
        %v648 = vadd.f32 %v517, %v602
        %v649 = vadd.f32 %v518, %v608
        %v650 = vadd.f32 %v519, %v614
        %v651 = vadd.f32 %v520, %v620
        %v652 = vadd.f32 %v521, %v626
        %v653 = vadd.f32 %v522, %v632
        %v654 = vadd.f32 %v523, %v638
        %v655 = vld [vmem:[#allocation2] sm:$0xff]
        %v656 = vld [vmem:[#allocation2 + $0x8] sm:$0xff]
        %vm673 = vcmask 1041409
        %v674 = vsel %vm673, %v641, %v639
        %vm675 = vcmask 1042434
        %v676 = vsel %vm675, %v643, %v674
        %vm677 = vcmask 1043459
        %v678 = vsel %vm677, %v645, %v676
        %vm679 = vcmask 1044484
        %v680 = vsel %vm679, %v647, %v678
        %vm681 = vcmask 1045509
        %v682 = vsel %vm681, %v649, %v680
        %vm683 = vcmask 1046534
        %v684 = vsel %vm683, %v651, %v682
        %vm685 = vcmask 1047559
        %v686 = vsel %vm685, %v653, %v684
        %v687 = vsel %vm673, %v642, %v640
        %v688 = vsel %vm675, %v644, %v687
        %v689 = vsel %vm677, %v646, %v688
        %v690 = vsel %vm679, %v648, %v689
        %v691 = vsel %vm681, %v650, %v690
        %v692 = vsel %vm683, %v652, %v691
        %v693 = vsel %vm685, %v654, %v692
        %v696 = vadd.f32 %v655, %v686
        %v697 = vadd.f32 %v656, %v693
        %698 = vst [vmem:[#allocation2] sm:$0xff] %v696
        %699 = vst [vmem:[#allocation2 + $0x8] sm:$0xff] %v697
        // Predicated region
        $region61: #{tpu_custom_call.1} parent=39 // pred_check
          %p700 = pneg %p387
        $region62: #{tpu_custom_call.1} parent=39 // pred_check_branch
          %702 = sbr.rel (%p700) target = $region64
        $region63: #{tpu_custom_call.1} parent=39 // pred_region
          %s703 = sld [smem:[#allocation3]]
          %v704 = vld [vmem:[%s331] sm:$0xff]
          %v705 = vld [vmem:[%s331 + $0x8] sm:$0xff]
          %v706 = vld [vmem:[%s341] sm:$0xff]
          %v707 = vld [vmem:[%s341 + $0x8] sm:$0xff]
          %v708 = vlaneseq
          %v709 = vshrl.u32 %v708, 7
          %v710 = vlaneseq
          %v711 = vand.u32 %v710, 127
          %v712 = vadd.s32 %v709, %v711
          %vm713 = vcmp.eq.s32.totalorder %v712, 7
          %v714 = vsel %vm713, 1.0, 0.0
          %vm715 = vcmask 64512
          %v717 = vsel %vm715, %v714, 0
          %719 = vmatpush.msra.mxu0 0.0
          %720 = vmatpush.msra.mxu0 0.0
          %721 = vmatpush.msra.mxu0 0.0
          %722 = vmatpush.msra.mxu0 0.0
          %723 = vmatpush.msra.mxu0 0.0
          %724 = vmatpush.msra.mxu0 0.0
          %725 = vmatpush.msra.mxu0 0.0
          %726 = vmatpush.msra.mxu0 0.0
          %727 = vmatpush.msra.mxu0 0.0
          %728 = vmatpush.msra.mxu0 0.0
          %729 = vmatpush.msra.mxu0 0.0
          %730 = vmatpush.msra.mxu0 0.0
          %731 = vmatpush.msra.mxu0 0.0
          %732 = vmatpush.msra.mxu0 0.0
          %733 = vmatpush.msra.mxu0 0.0
          %734 = vmatpush.msra.mxu0 %v706
          %735 = vmatmul.f32.gmra.mxu0 %v717
          %v736 = vpop.f32.mrf.mxu0
          %v737 = vadd.f32 0.0, %v736
          %738 = vdwg.mxu0
          %739 = vmatpush.msra.mxu0 0.0
          %740 = vmatpush.msra.mxu0 0.0
          %741 = vmatpush.msra.mxu0 0.0
          %742 = vmatpush.msra.mxu0 0.0
          %743 = vmatpush.msra.mxu0 0.0
          %744 = vmatpush.msra.mxu0 0.0
          %745 = vmatpush.msra.mxu0 0.0
          %746 = vmatpush.msra.mxu0 0.0
          %747 = vmatpush.msra.mxu0 0.0
          %748 = vmatpush.msra.mxu0 0.0
          %749 = vmatpush.msra.mxu0 0.0
          %750 = vmatpush.msra.mxu0 0.0
          %751 = vmatpush.msra.mxu0 0.0
          %752 = vmatpush.msra.mxu0 0.0
          %753 = vmatpush.msra.mxu0 0.0
          %754 = vmatpush.msra.mxu0 %v707
          %755 = vmatmul.f32.gmra.mxu0 %v717
          %v756 = vpop.f32.mrf.mxu0
          %v757 = vadd.f32 0.0, %v756
          %758 = vdwg.mxu0
          %v759 = vsub.f32 %v737, %v704
          %v760 = vsub.f32 %v757, %v705
          %v761 = vstv %s703
          %v762 = vmul.f32 %v761, %v759
          %v763 = vmul.f32 %v761, %v760
          %v764 = vadd.f32 %v704, %v762
          %v765 = vadd.f32 %v705, %v763
          %v766 = vld [vmem:[%s311] sm:$0xff]
          %v767 = vld [vmem:[%s311 + $0x8] sm:$0xff]
          %v768 = vld [vmem:[#allocation2] sm:$0xff]
          %v769 = vld [vmem:[#allocation2 + $0x8] sm:$0xff]
          %v770 = vmul.f32 %v768, 0.0625
          %v771 = vmul.f32 %v769, 0.0625
          %v772 = vmax.f32 %v766, %v767
          %773 = vmax.xlane.f32.xlu0 %v772
          %v774 = vpop.xlane.xlu0 %773
          %v775 = vsub.f32 %v766, %v774
          %v776 = vsub.f32 %v767, %v774
          %v777 = vmul.f32 %v775, 1.442695
          %v778 = vpow.pop %v777
          %v779 = vmul.f32 %v776, 1.442695
          %v780 = vpow.pop %v779
          %v781 = vadd.f32 %v778, %v780
          %782 = vadd.xlane.f32.xlu0 %v781
          %v783 = vpop.xlane.xlu0 %782
          %v784 = vlog2.pop %v783
          %v785 = vmul.f32 %v784, 0.6931472
          %v786 = vsub.f32 %v775, %v785
          %v787 = vsub.f32 %v776, %v785
          %v788 = vsub.f32 0.0, %v764
          %v789 = vsub.f32 0.0, %v765
          %v790 = vmul.f32 %v788, %v786
          %v791 = vmul.f32 %v789, %v787
          %v792 = vadd.f32 %v790, %v791
          %793 = vadd.xlane.f32.xlu0 %v792
          %v794 = vpop.xlane.xlu0 %793
          %v795 = vrot.slane %v794, 4
          %v796 = vadd.f32 %v794, %v795
          %v797 = vrot.slane %v796, 2
          %v798 = vadd.f32 %v796, %v797
          %v799 = vrot.slane %v798, 1
          %v800 = vadd.f32 %v798, %v799
          %s801 = vtos %v800
          %v802 = vmax.f32 %v770, %v771
          %803 = vmax.xlane.f32.xlu0 %v802
          %v804 = vpop.xlane.xlu0 %803
          %v805 = vsub.f32 %v770, %v804
          %v806 = vsub.f32 %v771, %v804
          %v807 = vmul.f32 %v805, 1.442695
          %v808 = vpow.pop %v807
          %v809 = vmul.f32 %v806, 1.442695
          %v810 = vpow.pop %v809
          %v811 = vadd.f32 %v808, %v810
          %812 = vadd.xlane.f32.xlu0 %v811
          %v813 = vpop.xlane.xlu0 %812
          %v814 = vlog2.pop %v813
          %v815 = vmul.f32 %v814, 0.6931472
          %v816 = vsub.f32 %v805, %v815
          %v817 = vsub.f32 %v806, %v815
          %v818 = vsub.f32 0.0, %v704
          %v819 = vsub.f32 0.0, %v705
          %v820 = vmul.f32 %v818, %v816
          %v821 = vmul.f32 %v819, %v817
          %v822 = vadd.f32 %v820, %v821
          %823 = vadd.xlane.f32.xlu0 %v822
          %v824 = vpop.xlane.xlu0 %823
          %v825 = vrot.slane %v824, 4
          %v826 = vadd.f32 %v824, %v825
          %v827 = vrot.slane %v826, 2
          %v828 = vadd.f32 %v826, %v827
          %v829 = vrot.slane %v828, 1
          %v830 = vadd.f32 %v828, %v829
          %s831 = vtos %v830
          %s832 = sadd.f32 %s801, %s831
          %v833 = vstv %s832
          %834 = vst [vmem:[%s383] sm:$0xff] %v833
        $region64: #{tpu_custom_call.1} parent=39 // pred_fallthru
          _
        %s835 = sand.u32 %s178, 1
        %s836 = scalar_lea.sflag [#allocation6], %s835
        %s837 = sand.u32 %s178, 1
        %s838 = smul.addr %s837, 8
        %s839 = scalar_lea.vmem [#allocation12], %s838
        // Predicated region
        $region65: #{tpu_custom_call.1} parent=39 // pred_check
          %p840 = pneg %p188
        $region66: #{tpu_custom_call.1} parent=39 // pred_check_branch
          %842 = sbr.rel (%p840) target = $region68
        $region67: #{tpu_custom_call.1} parent=39 // pred_region
          %844 = vsyncadd %s836, 0
          %s845 = smul.addr %s33, 8
          %s846 = scalar_lea.hbm %s5, %s845
          %s848 = sshll.u32 %s839, 4
          %s849 = int_to_ptr.vmem [resolvable:$true] %s848
          %s850 = sshll.u32 %s846, 4
          %s851 = int_to_ptr.hbm [resolvable:$true] %s850
          %853 = dma.vmem_to_hbm [thread:$0]  %s849, 128, %s851, %s836
        $region68: #{tpu_custom_call.1} parent=39 // pred_fallthru
          _
      $region40: #{tpu_custom_call.1} parent=5 // pred_fallthru
        _
      %p854 = scmp.le.s32.totalorder 2, %s24
      // Predicated region
      $region69: #{tpu_custom_call.1} parent=5 // pred_check
        %p855 = pneg %p854
      $region70: #{tpu_custom_call.1} parent=5 // pred_check_branch
        %857 = sbr.rel (%p855) target = $region72
      $region71: #{tpu_custom_call.1} parent=5 // pred_region
        %s858 = ssub.s32 %s24, 2
        // Predicated region
        $region73: #{tpu_custom_call.1} parent=71 // pred_check
          %p859 = pneg %p194
        $region74: #{tpu_custom_call.1} parent=71 // pred_check_branch
          %861 = sbr.rel (%p859) target = $region76
        $region75: #{tpu_custom_call.1} parent=71 // pred_region
          %s862 = sand.u32 %s179, 1
          %s863 = scalar_lea.sflag [#allocation6], %s862
          %s864 = sand.u32 %s179, 1
          %s865 = smul.addr %s864, 8
          %s866 = scalar_lea.vmem [#allocation12], %s865
          %868 = dma.done %s863, 128
        $region76: #{tpu_custom_call.1} parent=71 // pred_fallthru
          _
      $region72: #{tpu_custom_call.1} parent=5 // pred_fallthru
        _
    $region6: #{tpu_custom_call.1} parent=1 // loop_footer
      %s28 = sadd.s32 1, %s24
    $region7: #{tpu_custom_call.1} parent=1 // loop_footer_branch
      %23 = sbr.rel target = $region3
    $region8: #{tpu_custom_call.1} parent=1 // loop_exit
      _
    %869 = vsyncpa [#allocation5], 1
    %s870 = scalar_lea.sflag [#allocation5], 1
    %871 = vsyncpa %s870, 1
    %872 = vsyncpa [#allocation8], 1
    %s873 = scalar_lea.sflag [#allocation8], 1
    %874 = vsyncpa %s873, 1
    %875 = vsyncpa [#allocation11], 1
    %s876 = scalar_lea.sflag [#allocation11], 1
    %877 = vsyncpa %s876, 1
    %878 = vsyncpa [#allocation6], 1
    %s879 = scalar_lea.sflag [#allocation6], 1
    %880 = vsyncpa %s879, 1

</llo_original>
